<compile_context>
chip_gen: v5e
topology: v5e:2x2
jax: 0.10.0
libtpu: 0.0.40
codegen_flags: <defaults>
</compile_context>

<pallas_src>
import jax
import jax.numpy as jnp
from jax.experimental import pallas as pl
from jax.experimental.pallas import tpu as pltpu

OBS_DIM = 32
HIDDEN = 128
SHOT_TYPES = 10
LANDING_POS_N = 9
HEIGHT_LEVELS = 3
BINARY_N = 2  # backhand / aroundhead heads

HEAD_PAD = 128  # lane-dense fused head width (single 128-wide output slab)

# Column layout inside the fused 128-wide head slab.
_OFF_SHOT = 0
_OFF_LAND = _OFF_SHOT + SHOT_TYPES          # 10
_OFF_HEIGHT = _OFF_LAND + LANDING_POS_N     # 19
_OFF_BACK = _OFF_HEIGHT + HEIGHT_LEVELS     # 22
_OFF_AROUND = _OFF_BACK + BINARY_N          # 24
_HEAD_TOTAL = _OFF_AROUND + BINARY_N        # 26 (rest of the 128 lanes are zero pad)


def act_model_kernel(x_ref, w12_ref, b12_ref, wheads_ref, bheads_ref, woh_ref, out_ref):
    f32 = jnp.float32
    bf16 = jnp.bfloat16

    # Folded net: relu(x @ (W1 @ W2) + (b1 @ W2 + b2)); bf16 operands, f32 accum.
    feats = jnp.maximum(
        jnp.dot(x_ref[...], w12_ref[...], preferred_element_type=f32) + b12_ref[...],
        0.0,
    )

    # One fused (TM,128)x(128,128) matmul: all five heads' feats-side weights.
    heads = (
        jnp.dot(feats.astype(bf16), wheads_ref[...], preferred_element_type=f32)
        + bheads_ref[...]
    )

    # Eval-mode: argmax over the shot logits (lanes [0, SHOT_TYPES) of the slab),
    # tie-break = first index (torch.max semantics).
    tm = heads.shape[0]
    col = jax.lax.broadcasted_iota(jnp.int32, (tm, HEAD_PAD), 1)
    masked = jnp.where(col < SHOT_TYPES, heads, -jnp.inf)
    row_max = jnp.max(masked, axis=1, keepdims=True)
    arg = jnp.min(jnp.where(masked == row_max, col, HEAD_PAD), axis=1, keepdims=True)
    # TODO(synk): a NaN shot logit yields an all-zero one-hot here instead of
    # propagating NaN like the PyTorch reference.

    # 128-lane-wide one-hot (rows >= SHOT_TYPES of w_oh are zero, and w_oh's
    # shot-head columns are zero), single bf16 MXU matmul.
    onehot = (col == arg).astype(bf16)
    out = heads + jnp.dot(onehot, woh_ref[...], preferred_element_type=f32)
    out_ref[...] = out.astype(out_ref.dtype)


def _round_up(n, m):
    return ((n + m - 1) // m) * m


def _device_kind():
    try:
        return jax.devices()[0].device_kind.lower()
    except Exception:
        return ""


def _pick_tiling(batch):
    """Return (tile_rows, padded_batch, two_core) for the current TPU generation."""
    b16 = _round_up(max(batch, 1), 16)  # bf16 sublane tiling -> multiples of 16
    dk = _device_kind()
    two_core = any(t in dk for t in ("v7", "v5p", "v4"))  # 2 TensorCores / device
    if two_core:
        # >= 2 grid steps so the "parallel" batch axis is sharded over both TCs;
        # 64 MiB VMEM on v7x -> cap the tile at 2048 rows.
        tm = max(16, min(2048, _round_up(pl.cdiv(b16, 2), 16)))
    else:
        # Single TC (v5e/v6e): one big step when it fits (removes all per-step
        # pipeline overhead), otherwise large 2048-row tiles (~85% HBM roofline).
        tm = b16 if b16 <= 4096 else 2048
    steps = pl.cdiv(b16, tm)
    if two_core and steps > 1 and steps % 2:
        steps += 1  # keep step count even so both TensorCores stay busy
    return tm, steps * tm, two_core


@jax.jit
def act_model_forward(x, packed):
    """x: (B, OBS_DIM) float32 (or bfloat16).

    Returns the padded (B_pad, 128) bfloat16 logit slab. Use `split_logits`
    (or slice downstream, where XLA can fuse it) to extract the 5 heads; the
    slab is returned directly so the hot path never re-reads it from HBM just
    to materialize five small slice copies.
    """
    batch = x.shape[0]
    tm, b_pad, two_core = _pick_tiling(batch)
    if b_pad != batch:
        x = jnp.pad(x, ((0, b_pad - batch), (0, 0)))
    x = x.astype(jnp.bfloat16)

    flops = 2 * b_pad * (OBS_DIM * HIDDEN + 2 * HIDDEN * HEAD_PAD)
    bytes_accessed = (
        b_pad * (OBS_DIM + HEAD_PAD) * 2                  # x in + slab out (bf16)
        + (OBS_DIM * HIDDEN + 2 * HIDDEN * HEAD_PAD) * 2  # bf16 weights
        + 2 * HEAD_PAD * 4                                # f32 biases
    )

    cp_kwargs = dict(dimension_semantics=("parallel",))
    if not two_core:
        # v5e's scoped-VMEM default is only 16 MiB; raise it for the single
        # large tile (physical VMEM is 128 MiB on v5e/v6e).
        cp_kwargs["vmem_limit_bytes"] = 64 * 1024 * 1024

    slab = pl.pallas_call(
        act_model_kernel,
        out_shape=jax.ShapeDtypeStruct((b_pad, HEAD_PAD), jnp.bfloat16),
        grid=(b_pad // tm,),
        in_specs=[
            pl.BlockSpec((tm, OBS_DIM), lambda i: (i, 0)),        # x (bf16), row-tiled
            pl.BlockSpec((OBS_DIM, HIDDEN), lambda i: (0, 0)),    # W1@W2 (bf16, resident)
            pl.BlockSpec((1, HIDDEN), lambda i: (0, 0)),          # folded bias (f32)
            pl.BlockSpec((HIDDEN, HEAD_PAD), lambda i: (0, 0)),   # fused head W (bf16)
            pl.BlockSpec((1, HEAD_PAD), lambda i: (0, 0)),        # fused head b (f32)
            pl.BlockSpec((HIDDEN, HEAD_PAD), lambda i: (0, 0)),   # fused one-hot W (bf16)
        ],
        out_specs=pl.BlockSpec((tm, HEAD_PAD), lambda i: (i, 0)),
        compiler_params=pltpu.CompilerParams(**cp_kwargs),
        cost_estimate=pl.CostEstimate(
            flops=flops, transcendentals=0, bytes_accessed=bytes_accessed
        ),
    )(x, packed["w12"], packed["b12"], packed["w_heads"], packed["b_heads"], packed["w_oh"])
    return slab


def split_logits(slab, batch):
    """Slice the fused slab into the 5 logit arrays (fuse this downstream)."""
    slab = slab[:batch]
    return (
        slab[:, _OFF_SHOT:_OFF_SHOT + SHOT_TYPES],
        slab[:, _OFF_LAND:_OFF_LAND + LANDING_POS_N],
        slab[:, _OFF_HEIGHT:_OFF_HEIGHT + HEIGHT_LEVELS],
        slab[:, _OFF_BACK:_OFF_BACK + BINARY_N],
        slab[:, _OFF_AROUND:_OFF_AROUND + BINARY_N],
    )


def init_params(key):
    """Deterministic PyTorch-Linear-style params, pre-transposed to (in, out)."""
    ks = jax.random.split(key, 7)

    def lin(k, fan_in, fan_out):
        bound = 1.0 / jnp.sqrt(float(fan_in))
        kw, kb = jax.random.split(k)
        w = jax.random.uniform(kw, (fan_in, fan_out), jnp.float32, -bound, bound)
        b = jax.random.uniform(kb, (1, fan_out), jnp.float32, -bound, bound)
        return w, b

    p = {}
    p["w1"], p["b1"] = lin(ks[0], OBS_DIM, HIDDEN)
    p["w2"], p["b2"] = lin(ks[1], HIDDEN, HIDDEN)
    p["ws"], p["bs"] = lin(ks[2], HIDDEN, SHOT_TYPES)
    p["wl"], p["bl"] = lin(ks[3], HIDDEN + SHOT_TYPES, LANDING_POS_N)
    p["wh"], p["bh"] = lin(ks[4], HIDDEN + SHOT_TYPES, HEIGHT_LEVELS)
    p["wb"], p["bb"] = lin(ks[5], HIDDEN + SHOT_TYPES, BINARY_N)
    p["wa"], p["ba"] = lin(ks[6], HIDDEN + SHOT_TYPES, BINARY_N)
    return p


def pack_params(p):
    """Fold the stacked Linears, fuse the five heads, and cast weights to bf16."""
    f32 = jnp.float32
    bf16 = jnp.bfloat16
    w12 = jnp.dot(p["w1"], p["w2"])             # (32, 128)
    b12 = jnp.dot(p["b1"], p["w2"]) + p["b2"]   # (1, 128)

    w_heads = jnp.zeros((HIDDEN, HEAD_PAD), f32)
    b_heads = jnp.zeros((1, HEAD_PAD), f32)
    w_oh = jnp.zeros((HIDDEN, HEAD_PAD), f32)   # rows >= SHOT_TYPES stay zero

    def put(wh, bh, woh, w, b, off, n, has_onehot):
        wh = wh.at[:, off:off + n].set(w[:HIDDEN])
        bh = bh.at[:, off:off + n].set(b)
        if has_onehot:
            woh = woh.at[:SHOT_TYPES, off:off + n].set(w[HIDDEN:])
        return wh, bh, woh

    w_heads, b_heads, w_oh = put(w_heads, b_heads, w_oh, p["ws"], p["bs"], _OFF_SHOT, SHOT_TYPES, False)
    w_heads, b_heads, w_oh = put(w_heads, b_heads, w_oh, p["wl"], p["bl"], _OFF_LAND, LANDING_POS_N, True)
    w_heads, b_heads, w_oh = put(w_heads, b_heads, w_oh, p["wh"], p["bh"], _OFF_HEIGHT, HEIGHT_LEVELS, True)
    w_heads, b_heads, w_oh = put(w_heads, b_heads, w_oh, p["wb"], p["bb"], _OFF_BACK, BINARY_N, True)
    w_heads, b_heads, w_oh = put(w_heads, b_heads, w_oh, p["wa"], p["ba"], _OFF_AROUND, BINARY_N, True)

    return {
        "w12": w12.astype(bf16),
        "b12": b12,                       # f32 (added to the f32 accumulator)
        "w_heads": w_heads.astype(bf16),
        "b_heads": b_heads,               # f32
        "w_oh": w_oh.astype(bf16),
    }


def reference_forward(x, p):
    """Plain-JAX f32 reference mirroring the PyTorch eval-mode forward (unfused)."""
    feats = jnp.maximum((x @ p["w1"] + p["b1"]) @ p["w2"] + p["b2"], 0.0)
    shot_logits = feats @ p["ws"] + p["bs"]
    onehot = jax.nn.one_hot(jnp.argmax(shot_logits, axis=1), SHOT_TYPES, dtype=jnp.float32)
    combined = jnp.concatenate([feats, onehot], axis=1)
    land = combined @ p["wl"] + p["bl"]
    height = combined @ p["wh"] + p["bh"]
    back = combined @ p["wb"] + p["bb"]
    around = combined @ p["wa"] + p["ba"]
    return shot_logits, land, height, back, around


if __name__ == "__main__":
    key = jax.random.PRNGKey(0)
    k_param, k_x = jax.random.split(key)
    raw = init_params(k_param)
    packed = pack_params(raw)

    batch = 8
    x = jax.random.normal(k_x, (batch, OBS_DIM), jnp.float32)

    slab = act_model_forward(x, packed)
    slab = jax.block_until_ready(slab)

    outs = split_logits(slab, batch)
    refs = reference_forward(x, raw)

    # bf16 operands / bf16 output -> loose tolerance vs the f32 reference.
    TOL = 7.5e-2
    shot_k = outs[0].astype(jnp.float32)
    shot_r = refs[0]
    assert shot_k.shape == shot_r.shape
    assert bool(jnp.allclose(shot_k, shot_r, atol=TOL, rtol=TOL)), "shot logits mismatch"

    # Only compare one-hot-dependent heads on rows where the (bf16) kernel and
    # the f32 reference pick the same shot argmax (they diverge legitimately on
    # near-ties introduced by bf16 rounding).
    agree = (jnp.argmax(shot_k, axis=1) == jnp.argmax(shot_r, axis=1))[:, None]
    for o, r in zip(outs[1:], refs[1:]):
        o32 = o.astype(jnp.float32)
        assert o32.shape == r.shape
        err = jnp.where(agree, jnp.abs(o32 - r), 0.0)
        assert float(jnp.max(err)) < TOL, "head logits mismatch vs reference"

    print("KERNEL_OK")
</pallas_src>

<mosaic_0001>
module attributes {stable_mosaic.version = 11 : i64} {
  func.func @act_model_kernel(%arg0: i32, %arg1: memref<16x32xbf16, #tpu.memory_space<vmem>>, %arg2: memref<32x128xbf16, #tpu.memory_space<vmem>>, %arg3: memref<1x128xf32, #tpu.memory_space<vmem>>, %arg4: memref<128x128xbf16, #tpu.memory_space<vmem>>, %arg5: memref<1x128xf32, #tpu.memory_space<vmem>>, %arg6: memref<128x128xbf16, #tpu.memory_space<vmem>>, %arg7: memref<16x128xbf16, #tpu.memory_space<vmem>>) attributes {dimension_semantics = [#tpu.dimension_semantics<parallel>], iteration_bounds = array<i64: 1>, scalar_prefetch = 0 : i64, scratch_operands = 0 : i64, tpu.core_type = #tpu.core_type<tc>, window_params = [{transform_indices = @transform_0, window_bounds = array<i64: 16, 32>}, {pipeline_mode = #tpu.pipeline_mode<synchronous>, transform_indices = @transform_1, window_bounds = array<i64: 32, 128>}, {pipeline_mode = #tpu.pipeline_mode<synchronous>, transform_indices = @transform_2, window_bounds = array<i64: 1, 128>}, {pipeline_mode = #tpu.pipeline_mode<synchronous>, transform_indices = @transform_3, window_bounds = array<i64: 128, 128>}, {pipeline_mode = #tpu.pipeline_mode<synchronous>, transform_indices = @transform_4, window_bounds = array<i64: 1, 128>}, {pipeline_mode = #tpu.pipeline_mode<synchronous>, transform_indices = @transform_5, window_bounds = array<i64: 128, 128>}, {transform_indices = @transform_6, window_bounds = array<i64: 16, 128>}]} {
    %c0 = arith.constant 0 : index
    %c0_0 = arith.constant 0 : index
    %0 = vector.load %arg1[%c0, %c0_0] : memref<16x32xbf16, #tpu.memory_space<vmem>>, vector<16x32xbf16>
    %c0_1 = arith.constant 0 : index
    %c0_2 = arith.constant 0 : index
    %1 = vector.load %arg2[%c0_1, %c0_2] : memref<32x128xbf16, #tpu.memory_space<vmem>>, vector<32x128xbf16>
    %cst = arith.constant dense<0.000000e+00> : vector<16x128xf32>
    %2 = tpu.matmul %0, %1, %cst {dimension_numbers = #tpu.dot_dimension_numbers<[1], [0], [0], [1], [0, 0, 1, 1], [], []>} : vector<16x32xbf16>, vector<32x128xbf16>, vector<16x128xf32> -> vector<16x128xf32>
    %c0_3 = arith.constant 0 : index
    %c0_4 = arith.constant 0 : index
    %3 = vector.load %arg3[%c0_3, %c0_4] : memref<1x128xf32, #tpu.memory_space<vmem>>, vector<1x128xf32>
    %4 = vector.broadcast %3 : vector<1x128xf32> to vector<16x128xf32>
    %5 = arith.addf %2, %4 : vector<16x128xf32>
    %cst_5 = arith.constant 0.000000e+00 : f32
    %6 = vector.broadcast %cst_5 : f32 to vector<16x128xf32>
    %7 = arith.maximumf %5, %6 : vector<16x128xf32>
    %8 = arith.truncf %7 : vector<16x128xf32> to vector<16x128xbf16>
    %c0_6 = arith.constant 0 : index
    %c0_7 = arith.constant 0 : index
    %9 = vector.load %arg4[%c0_6, %c0_7] : memref<128x128xbf16, #tpu.memory_space<vmem>>, vector<128x128xbf16>
    %cst_8 = arith.constant dense<0.000000e+00> : vector<16x128xf32>
    %10 = tpu.matmul %8, %9, %cst_8 {dimension_numbers = #tpu.dot_dimension_numbers<[1], [0], [0], [1], [0, 0, 1, 1], [], []>} : vector<16x128xbf16>, vector<128x128xbf16>, vector<16x128xf32> -> vector<16x128xf32>
    %c0_9 = arith.constant 0 : index
    %c0_10 = arith.constant 0 : index
    %11 = vector.load %arg5[%c0_9, %c0_10] : memref<1x128xf32, #tpu.memory_space<vmem>>, vector<1x128xf32>
    %12 = vector.broadcast %11 : vector<1x128xf32> to vector<16x128xf32>
    %13 = arith.addf %10, %12 : vector<16x128xf32>
    %14 = tpu.iota {dimensions = array<i32: 1>} : vector<16x128xi32>
    %c10_i32 = arith.constant 10 : i32
    %15 = vector.broadcast %c10_i32 : i32 to vector<16x128xi32>
    %16 = arith.cmpi slt, %14, %15 : vector<16x128xi32>
    %cst_11 = arith.constant 0xFF800000 : f32
    %17 = vector.broadcast %cst_11 : f32 to vector<16x128xf32>
    %18 = arith.select %16, %13, %17 : vector<16x128xi1>, vector<16x128xf32>
    %cst_12 = arith.constant dense<0xFF800000> : vector<16xf32>
    %19 = vector.multi_reduction <maximumf>, %18, %cst_12 [1] : vector<16x128xf32> to vector<16xf32>
    %20 = vector.shape_cast %19 : vector<16xf32> to vector<16x1xf32>
    %21 = vector.broadcast %20 : vector<16x1xf32> to vector<16x128xf32>
    %22 = arith.cmpf oeq, %18, %21 : vector<16x128xf32>
    %c128_i32 = arith.constant 128 : i32
    %23 = vector.broadcast %c128_i32 : i32 to vector<16x128xi32>
    %24 = arith.select %22, %14, %23 : vector<16x128xi1>, vector<16x128xi32>
    %cst_13 = arith.constant dense<2147483647> : vector<16xi32>
    %25 = vector.multi_reduction <minsi>, %24, %cst_13 [1] : vector<16x128xi32> to vector<16xi32>
    %26 = vector.shape_cast %25 : vector<16xi32> to vector<16x1xi32>
    %27 = vector.broadcast %26 : vector<16x1xi32> to vector<16x128xi32>
    %28 = arith.cmpi eq, %14, %27 : vector<16x128xi32>
    %29 = arith.extui %28 : vector<16x128xi1> to vector<16x128xi32>
    %30 = arith.sitofp %29 : vector<16x128xi32> to vector<16x128xf32>
    %31 = arith.truncf %30 : vector<16x128xf32> to vector<16x128xbf16>
    %c0_14 = arith.constant 0 : index
    %c0_15 = arith.constant 0 : index
    %32 = vector.load %arg6[%c0_14, %c0_15] : memref<128x128xbf16, #tpu.memory_space<vmem>>, vector<128x128xbf16>
    %cst_16 = arith.constant dense<0.000000e+00> : vector<16x128xf32>
    %33 = tpu.matmul %31, %32, %cst_16 {dimension_numbers = #tpu.dot_dimension_numbers<[1], [0], [0], [1], [0, 0, 1, 1], [], []>} : vector<16x128xbf16>, vector<128x128xbf16>, vector<16x128xf32> -> vector<16x128xf32>
    %34 = arith.addf %13, %33 : vector<16x128xf32>
    %35 = arith.truncf %34 : vector<16x128xf32> to vector<16x128xbf16>
    %c0_17 = arith.constant 0 : index
    %c0_18 = arith.constant 0 : index
    %36 = vector.load %arg7[%c0_17, %c0_18] : memref<16x128xbf16, #tpu.memory_space<vmem>>, vector<16x128xbf16>
    tpu.vector_store %arg7[%c0_17, %c0_18], %35 {strides = array<i32>} : memref<16x128xbf16, #tpu.memory_space<vmem>>, vector<16x128xbf16>,
    return
  }
  func.func @transform_0(%arg0: i32) -> (i32, i32) {
    %c0_i32 = arith.constant 0 : i32
    %c0_i32_0 = arith.constant 0 : i32
    return %arg0, %c0_i32 : i32, i32
  }
  func.func @transform_1(%arg0: i32) -> (i32, i32) {
    %c0_i32 = arith.constant 0 : i32
    %c0_i32_0 = arith.constant 0 : i32
    %c0_i32_1 = arith.constant 0 : i32
    return %c0_i32, %c0_i32_0 : i32, i32
  }
  func.func @transform_2(%arg0: i32) -> (i32, i32) {
    %c0_i32 = arith.constant 0 : i32
    %c0_i32_0 = arith.constant 0 : i32
    %c0_i32_1 = arith.constant 0 : i32
    return %c0_i32, %c0_i32_0 : i32, i32
  }
  func.func @transform_3(%arg0: i32) -> (i32, i32) {
    %c0_i32 = arith.constant 0 : i32
    %c0_i32_0 = arith.constant 0 : i32
    %c0_i32_1 = arith.constant 0 : i32
    return %c0_i32, %c0_i32_0 : i32, i32
  }
  func.func @transform_4(%arg0: i32) -> (i32, i32) {
    %c0_i32 = arith.constant 0 : i32
    %c0_i32_0 = arith.constant 0 : i32
    %c0_i32_1 = arith.constant 0 : i32
    return %c0_i32, %c0_i32_0 : i32, i32
  }
  func.func @transform_5(%arg0: i32) -> (i32, i32) {
    %c0_i32 = arith.constant 0 : i32
    %c0_i32_0 = arith.constant 0 : i32
    %c0_i32_1 = arith.constant 0 : i32
    return %c0_i32, %c0_i32_0 : i32, i32
  }
  func.func @transform_6(%arg0: i32) -> (i32, i32) {
    %c0_i32 = arith.constant 0 : i32
    %c0_i32_0 = arith.constant 0 : i32
    return %arg0, %c0_i32 : i32, i32
  }
}

</mosaic_0001>

<llo_original>
// kernel: act_model_forward.1
$region0: #{act_model_forward.1}
  #allocation0 [shape = 'u32[]', space=smem, size = 0x4, offset = 0x4, fixed_abs, tag = 'smem constant byte address 0x4 - core index']
  #allocation1 [shape = 'u32[72,128]{1,0:T(1,128)}', space=vmem, size = 0x9000, scoped, tag = 'internal scratch']
  %s0 = inlined_call_operand.vmem [shape: bf16[16,32], index: 0, kind: input, shape index: {}]
  %s1 = inlined_call_operand.vmem [shape: bf16[32,128], index: 1, kind: input, shape index: {}]
  %s2 = inlined_call_operand.vmem [shape: f32[1,128], index: 2, kind: input, shape index: {}]
  %s3 = inlined_call_operand.hbm [shape: bf16[128,128], index: 3, kind: input, shape index: {}]
  %s4 = inlined_call_operand.vmem [shape: f32[1,128], index: 4, kind: input, shape index: {}]
  %s5 = inlined_call_operand.hbm [shape: bf16[128,128], index: 5, kind: input, shape index: {}]
  %s6 = inlined_call_operand.hbm [shape: bf16[16,128], index: 6, kind: output, shape index: {}]
  %s7 = sld [smem:[#allocation0]]
  $region42: #{act_model_forward.1} parent=0
    _
  %s9 = ssub.s32 1, %s7
  %s10 = scalar_select 0, %s9, %s7
  $region1: #{act_model_forward.1} parent=0
    #allocation2 [shape = 'u8[32768]{0}', space=vmem, size = 0x8000, scoped, tag = 'input window, operand 3, single buffered']
    #allocation3 [shape = 's32[1]{0}', space=sflag, size = 0x4, scoped, tag = 'scoped memory for act_model_forward.1']
    #allocation4 [shape = 's32[1]{0}', space=sflag, size = 0x4, scoped, tag = 'scoped memory for act_model_forward.1']
    #allocation5 [shape = 'u8[32768]{0}', space=vmem, size = 0x8000, scoped, tag = 'input window, operand 5, single buffered']
    #allocation6 [shape = 's32[1]{0}', space=sflag, size = 0x4, scoped, tag = 'scoped memory for act_model_forward.1']
    #allocation7 [shape = 'u8[4096]{0}', space=vmem, size = 0x1000, scoped, tag = 'output window, operand 0, single buffered']
    %11 = vsyncpa [#allocation3], 0
    %12 = vsyncpa [#allocation6], 0
    %13 = vsyncpa [#allocation4], 0
    // Predicated region
    $region2: #{act_model_forward.1} parent=1 // pred_check
      _
    $region3: #{act_model_forward.1} parent=1 // pred_check_branch
      %15 = sbr.rel (0) target = $region5
    $region4: #{act_model_forward.1} parent=1 // pred_region
      _
    $region5: #{act_model_forward.1} parent=1 // pred_fallthru
      _
    // Predicated region
    $region6: #{act_model_forward.1} parent=1 // pred_check
      _
    $region7: #{act_model_forward.1} parent=1 // pred_check_branch
      %17 = sbr.rel (0) target = $region9
    $region8: #{act_model_forward.1} parent=1 // pred_region
      _
    $region9: #{act_model_forward.1} parent=1 // pred_fallthru
      _
    // Predicated region
    $region10: #{act_model_forward.1} parent=1 // pred_check
      _
    $region11: #{act_model_forward.1} parent=1 // pred_check_branch
      %19 = sbr.rel (0) target = $region13
    $region12: #{act_model_forward.1} parent=1 // pred_region
      _
    $region13: #{act_model_forward.1} parent=1 // pred_fallthru
      _
    // Predicated region
    $region14: #{act_model_forward.1} parent=1 // pred_check
      _
    $region15: #{act_model_forward.1} parent=1 // pred_check_branch
      %21 = sbr.rel (0) target = $region17
    $region16: #{act_model_forward.1} parent=1 // pred_region
      %23 = vsyncadd [#allocation3], 0
      %s24 = sshll.u32 %s3, 4
      %s25 = int_to_ptr.hbm [resolvable:$true] %s24
      %s26 = sshll.u32 [#allocation2], 4
      %s27 = int_to_ptr.vmem [resolvable:$true] %s26
      %32 = dma.hbm_to_vmem [thread:$0]  %s25, 1024, %s27, [#allocation3], 64, 64, 4
    $region17: #{act_model_forward.1} parent=1 // pred_fallthru
      _
    // Predicated region
    $region18: #{act_model_forward.1} parent=1 // pred_check
      _
    $region19: #{act_model_forward.1} parent=1 // pred_check_branch
      %34 = sbr.rel (0) target = $region21
    $region20: #{act_model_forward.1} parent=1 // pred_region
      _
    $region21: #{act_model_forward.1} parent=1 // pred_fallthru
      _
    // Predicated region
    $region22: #{act_model_forward.1} parent=1 // pred_check
      _
    $region23: #{act_model_forward.1} parent=1 // pred_check_branch
      %36 = sbr.rel (0) target = $region25
    $region24: #{act_model_forward.1} parent=1 // pred_region
      %38 = vsyncadd [#allocation6], 0
      %s39 = sshll.u32 %s5, 4
      %s40 = int_to_ptr.hbm [resolvable:$true] %s39
      %s41 = sshll.u32 [#allocation5], 4
      %s42 = int_to_ptr.vmem [resolvable:$true] %s41
      %47 = dma.hbm_to_vmem [thread:$0]  %s40, 1024, %s42, [#allocation6], 64, 64, 4
    $region25: #{act_model_forward.1} parent=1 // pred_fallthru
      _
    // Predicated region
    $region26: #{act_model_forward.1} parent=1 // pred_check
      _
    $region27: #{act_model_forward.1} parent=1 // pred_check_branch
      %49 = sbr.rel (0) target = $region29
    $region28: #{act_model_forward.1} parent=1 // pred_region
      %51 = dma.done [#allocation3], 1024
    $region29: #{act_model_forward.1} parent=1 // pred_fallthru
      _
    // Predicated region
    $region30: #{act_model_forward.1} parent=1 // pred_check
      _
    $region31: #{act_model_forward.1} parent=1 // pred_check_branch
      %53 = sbr.rel (0) target = $region33
    $region32: #{act_model_forward.1} parent=1 // pred_region
      %55 = dma.done [#allocation6], 1024
    $region33: #{act_model_forward.1} parent=1 // pred_fallthru
      _
    %v57 = vld [vmem:[%s0] sm:$0xf]
    %v58 = vld [vmem:[%s0 + $0x4] sm:$0xf]
    %v59 = vld [vmem:[%s1] sm:$0xf]
    %v60 = vld [vmem:[%s1 + $0x4] sm:$0xf]
    %v61 = vld [vmem:[%s1 + $0x8] sm:$0xf]
    %v62 = vld [vmem:[%s1 + $0xc] sm:$0xf]
    %v63 = vld [vmem:[%s2] sm:$0x1]
    %v65 = vperm.slane %v63, 0
    %v69 = vunpack.c.l.b16 %v57
    %v70 = vunpack.c.l.b16 %v58
    %v71 = vpack.c.b16 %v70, %v69
    %v76 = vunpack.c.l.b16 %v59
    %v77 = vunpack.c.l.b16 %v60
    %v78 = vunpack.c.l.b16 %v61
    %v79 = vunpack.c.l.b16 %v62
    %v80 = vpack.c.b16 %v77, %v76
    %v81 = vpack.c.b16 %v79, %v78
    %vm84 = vcmask 261120
    %v86 = vsel %vm84, %v71, 0
    %88 = vmatpush.bf16.msra.mxu0 0
    %89 = vmatpush.bf16.msra.mxu0 0
    %90 = vmatpush.bf16.msra.mxu0 0
    %91 = vmatpush.bf16.msra.mxu0 0
    %92 = vmatpush.bf16.msra.mxu0 0
    %93 = vmatpush.bf16.msra.mxu0 0
    %94 = vmatpush.bf16.msra.mxu0 %v81
    %95 = vmatpush.bf16.msra.mxu0 %v80
    %96 = vmatmul.bf16.gmra.mxu0 %v86
    %v97 = vpop.f32.mrf.mxu0
    %v98 = vadd.f32 %v65, %v97
    %v99 = vpop.f32.mrf.mxu0
    %v100 = vadd.f32 %v65, %v99
    %101 = vdwg.mxu0
    %v102 = vmax.f32 %v98, 0.0
    %v103 = vmax.f32 %v100, 0.0
    %v104 = vpack.c.bf16 %v103, %v102
    %v105 = vld [vmem:[#allocation2] sm:$0xf]
    %v106 = vld [vmem:[#allocation2 + $0x4] sm:$0xf]
    %v107 = vld [vmem:[#allocation2 + $0x8] sm:$0xf]
    %v108 = vld [vmem:[#allocation2 + $0xc] sm:$0xf]
    %v109 = vld [vmem:[#allocation2 + $0x10] sm:$0xf]
    %v110 = vld [vmem:[#allocation2 + $0x14] sm:$0xf]
    %v111 = vld [vmem:[#allocation2 + $0x18] sm:$0xf]
    %v112 = vld [vmem:[#allocation2 + $0x1c] sm:$0xf]
    %v113 = vld [vmem:[#allocation2 + $0x20] sm:$0xf]
    %v114 = vld [vmem:[#allocation2 + $0x24] sm:$0xf]
    %v115 = vld [vmem:[#allocation2 + $0x28] sm:$0xf]
    %v116 = vld [vmem:[#allocation2 + $0x2c] sm:$0xf]
    %v117 = vld [vmem:[#allocation2 + $0x30] sm:$0xf]
    %v118 = vld [vmem:[#allocation2 + $0x34] sm:$0xf]
    %v119 = vld [vmem:[#allocation2 + $0x38] sm:$0xf]
    %v120 = vld [vmem:[#allocation2 + $0x3c] sm:$0xf]
    %v121 = vld [vmem:[%s4] sm:$0x1]
    %v123 = vperm.slane %v121, 0
    %v141 = vunpack.c.l.b16 %v105
    %v142 = vunpack.c.l.b16 %v106
    %v143 = vunpack.c.l.b16 %v107
    %v144 = vunpack.c.l.b16 %v108
    %v145 = vunpack.c.l.b16 %v109
    %v146 = vunpack.c.l.b16 %v110
    %v147 = vunpack.c.l.b16 %v111
    %v148 = vunpack.c.l.b16 %v112
    %v149 = vunpack.c.l.b16 %v113
    %v150 = vunpack.c.l.b16 %v114
    %v151 = vunpack.c.l.b16 %v115
    %v152 = vunpack.c.l.b16 %v116
    %v153 = vunpack.c.l.b16 %v117
    %v154 = vunpack.c.l.b16 %v118
    %v155 = vunpack.c.l.b16 %v119
    %v156 = vunpack.c.l.b16 %v120
    %v157 = vpack.c.b16 %v142, %v141
    %v158 = vpack.c.b16 %v144, %v143
    %v159 = vpack.c.b16 %v146, %v145
    %v160 = vpack.c.b16 %v148, %v147
    %v161 = vpack.c.b16 %v150, %v149
    %v162 = vpack.c.b16 %v152, %v151
    %v163 = vpack.c.b16 %v154, %v153
    %v164 = vpack.c.b16 %v156, %v155
    %173 = vmatpush.bf16.msra.mxu0 %v164
    %174 = vmatpush.bf16.msra.mxu0 %v163
    %175 = vmatpush.bf16.msra.mxu0 %v162
    %176 = vmatpush.bf16.msra.mxu0 %v161
    %177 = vmatpush.bf16.msra.mxu0 %v160
    %178 = vmatpush.bf16.msra.mxu0 %v159
    %179 = vmatpush.bf16.msra.mxu0 %v158
    %180 = vmatpush.bf16.msra.mxu0 %v157
    %181 = vmatmul.bf16.gmra.mxu0 %v104
    %v182 = vpop.f32.mrf.mxu0
    %v183 = vadd.f32 %v123, %v182
    %v184 = vpop.f32.mrf.mxu0
    %v185 = vadd.f32 %v123, %v184
    %186 = vdwg.mxu0
    %v187 = vlaneseq
    %v188 = vand.u32 %v187, 127
    %vm189 = vcmp.lt.s32.totalorder %v188, 10
    %v190 = vsel %vm189, %v183, -inf
    %v191 = vsel %vm189, %v185, -inf
    %192 = vmax.xlane.f32.xlu0 %v190
    %v193 = vpop.xlane.xlu0 %192
    %194 = vmax.xlane.f32.xlu0 %v191
    %v195 = vpop.xlane.xlu0 %194
    %vm196 = vcmp.eq.f32.partialorder %v190, %v193
    %vm197 = vcmp.eq.f32.partialorder %v191, %v195
    %v198 = vsel %vm196, %v188, 128
    %v199 = vsel %vm197, %v188, 128
    %v200 = vand.u32 %v198, 65535
    %v201 = vshra.s32 %v198, 16
    %v202 = vcvt.s32.f32 %v200
    %v203 = vcvt.s32.f32 %v201
    %204 = vmin.xlane.f32.xlu0 %v203
    %v205 = vpop.xlane.xlu0 %204
    %vm206 = vcmp.eq.f32.partialorder %v203, %v205
    %v207 = vsel %vm206, %v202, inf
    %208 = vmin.xlane.f32.xlu0 %v207
    %v209 = vpop.xlane.xlu0 %208
    %v210 = vcvt.f32.s32 %v209
    %v211 = vcvt.f32.s32 %v205
    %v212 = vshll.u32 %v211, 16
    %v213 = vadd.s32 %v212, %v210
    %v214 = vand.u32 %v199, 65535
    %v215 = vshra.s32 %v199, 16
    %v216 = vcvt.s32.f32 %v214
    %v217 = vcvt.s32.f32 %v215
    %218 = vmin.xlane.f32.xlu0 %v217
    %v219 = vpop.xlane.xlu0 %218
    %vm220 = vcmp.eq.f32.partialorder %v217, %v219
    %v221 = vsel %vm220, %v216, inf
    %222 = vmin.xlane.f32.xlu0 %v221
    %v223 = vpop.xlane.xlu0 %222
    %v224 = vcvt.f32.s32 %v223
    %v225 = vcvt.f32.s32 %v219
    %v226 = vshll.u32 %v225, 16
    %v227 = vadd.s32 %v226, %v224
    %vm228 = vcmp.eq.s32.totalorder %v188, %v213
    %vm229 = vcmp.eq.s32.totalorder %v188, %v227
    %v230 = vsel %vm228, 1, 0
    %v231 = vsel %vm229, 1, 0
    %v232 = vcvt.s32.f32 %v230
    %v233 = vcvt.s32.f32 %v231
    %v234 = vpack.c.bf16 %v233, %v232
    %v235 = vld [vmem:[#allocation5] sm:$0xf]
    %v236 = vld [vmem:[#allocation5 + $0x4] sm:$0xf]
    %v237 = vld [vmem:[#allocation5 + $0x8] sm:$0xf]
    %v238 = vld [vmem:[#allocation5 + $0xc] sm:$0xf]
    %v239 = vld [vmem:[#allocation5 + $0x10] sm:$0xf]
    %v240 = vld [vmem:[#allocation5 + $0x14] sm:$0xf]
    %v241 = vld [vmem:[#allocation5 + $0x18] sm:$0xf]
    %v242 = vld [vmem:[#allocation5 + $0x1c] sm:$0xf]
    %v243 = vld [vmem:[#allocation5 + $0x20] sm:$0xf]
    %v244 = vld [vmem:[#allocation5 + $0x24] sm:$0xf]
    %v245 = vld [vmem:[#allocation5 + $0x28] sm:$0xf]
    %v246 = vld [vmem:[#allocation5 + $0x2c] sm:$0xf]
    %v247 = vld [vmem:[#allocation5 + $0x30] sm:$0xf]
    %v248 = vld [vmem:[#allocation5 + $0x34] sm:$0xf]
    %v249 = vld [vmem:[#allocation5 + $0x38] sm:$0xf]
    %v250 = vld [vmem:[#allocation5 + $0x3c] sm:$0xf]
    %v267 = vunpack.c.l.b16 %v235
    %v268 = vunpack.c.l.b16 %v236
    %v269 = vunpack.c.l.b16 %v237
    %v270 = vunpack.c.l.b16 %v238
    %v271 = vunpack.c.l.b16 %v239
    %v272 = vunpack.c.l.b16 %v240
    %v273 = vunpack.c.l.b16 %v241
    %v274 = vunpack.c.l.b16 %v242
    %v275 = vunpack.c.l.b16 %v243
    %v276 = vunpack.c.l.b16 %v244
    %v277 = vunpack.c.l.b16 %v245
    %v278 = vunpack.c.l.b16 %v246
    %v279 = vunpack.c.l.b16 %v247
    %v280 = vunpack.c.l.b16 %v248
    %v281 = vunpack.c.l.b16 %v249
    %v282 = vunpack.c.l.b16 %v250
    %v283 = vpack.c.b16 %v268, %v267
    %v284 = vpack.c.b16 %v270, %v269
    %v285 = vpack.c.b16 %v272, %v271
    %v286 = vpack.c.b16 %v274, %v273
    %v287 = vpack.c.b16 %v276, %v275
    %v288 = vpack.c.b16 %v278, %v277
    %v289 = vpack.c.b16 %v280, %v279
    %v290 = vpack.c.b16 %v282, %v281
    %299 = vmatpush.bf16.msra.mxu0 %v290
    %300 = vmatpush.bf16.msra.mxu0 %v289
    %301 = vmatpush.bf16.msra.mxu0 %v288
    %302 = vmatpush.bf16.msra.mxu0 %v287
    %303 = vmatpush.bf16.msra.mxu0 %v286
    %304 = vmatpush.bf16.msra.mxu0 %v285
    %305 = vmatpush.bf16.msra.mxu0 %v284
    %306 = vmatpush.bf16.msra.mxu0 %v283
    %307 = vmatmul.bf16.gmra.mxu0 %v234
    %v308 = vpop.f32.mrf.mxu0
    %v309 = vadd.f32 0.0, %v308
    %v310 = vpop.f32.mrf.mxu0
    %v311 = vadd.f32 0.0, %v310
    %312 = vdwg.mxu0
    %v313 = vadd.f32 %v183, %v309
    %v314 = vadd.f32 %v185, %v311
    %v315 = vpack.c.bf16 %v313, %v313
    %v316 = vpack.c.bf16 %v314, %v314
    %317 = vst [vmem:[#allocation7] sm:$0xf] %v315
    %318 = vst [vmem:[#allocation7 + $0x4] sm:$0xf] %v316
    // Predicated region
    $region34: #{act_model_forward.1} parent=1 // pred_check
      _
    $region35: #{act_model_forward.1} parent=1 // pred_check_branch
      %320 = sbr.rel (0) target = $region37
    $region36: #{act_model_forward.1} parent=1 // pred_region
      %322 = vsyncadd [#allocation4], 0
      %s323 = sshll.u32 [#allocation7], 4
      %s324 = int_to_ptr.vmem [resolvable:$true] %s323
      %s325 = sshll.u32 %s6, 4
      %s326 = int_to_ptr.hbm [resolvable:$true] %s325
      %331 = dma.vmem_to_hbm [thread:$0]  %s324, 128, %s326, [#allocation4], 64, 64, 4
    $region37: #{act_model_forward.1} parent=1 // pred_fallthru
      _
    // Predicated region
    $region38: #{act_model_forward.1} parent=1 // pred_check
      _
    $region39: #{act_model_forward.1} parent=1 // pred_check_branch
      %333 = sbr.rel (0) target = $region41
    $region40: #{act_model_forward.1} parent=1 // pred_region
      %335 = dma.done [#allocation4], 128
    $region41: #{act_model_forward.1} parent=1 // pred_fallthru
      _
    %336 = vsyncpa [#allocation3], 1
    %337 = vsyncpa [#allocation6], 1
    %338 = vsyncpa [#allocation4], 1

</llo_original>
